<compile_context>
chip_gen: v7x
topology: tpu7x:2x2x1
jax: 0.10.0
libtpu: 0.0.40
codegen_flags: <defaults>
</compile_context>

<pallas_src>
import functools

import jax
import jax.numpy as jnp
from jax.experimental import pallas as pl
from jax.experimental.pallas import tpu as pltpu

LANE = 128
TILE_N = 256          # Â row tile (node rows per grid step along axis i)
TILE_K = 512          # Â column tile (node columns per grid step along axis k)


def _round_up(v, m):
    return (v + m - 1) // m * m


def gcnn_kernel(a_ref, xw1_ref, b1_ref, p_ref, wo_ref, bo_ref,
                out_ref, ax_acc, z_acc, *, num_classes):
    i = pl.program_id(0)          # node-row tile
    k = pl.program_id(1)          # node-column (reduction) tile
    n_i = pl.num_programs(0)
    n_k = pl.num_programs(1)

    @pl.when(jnp.logical_and(i == 0, k == 0))
    def _init_pool_acc():
        z_acc[...] = jnp.zeros_like(z_acc)

    @pl.when(k == 0)
    def _init_row_acc():
        ax_acc[...] = jnp.zeros_like(ax_acc)

    # Dequantize the int8 Â tile on the VPU (free under the DMA; the dequant
    # scale is pre-folded into XW1) and accumulate Â_tile @ (X W1) in f32.
    a_bf = a_ref[...].astype(jnp.float32).astype(jnp.bfloat16)
    ax_acc[...] += jnp.dot(a_bf, xw1_ref[...],
                           preferred_element_type=jnp.float32)

    last_k = k == n_k - 1

    @pl.when(last_k)
    def _pool_row_tile():
        # GCNConv bias + ReLU, then global-mean-pool partial sum:
        # Z += P[:, row_tile] @ relu(Â_tile @ X W1 + b1)
        # (P rows already hold 1/|graph|, so the accumulated sum is the mean.)
        h = jnp.maximum(ax_acc[...] + b1_ref[...], 0.0)
        z_acc[...] += jnp.dot(p_ref[...], h, preferred_element_type=jnp.float32)

    @pl.when(jnp.logical_and(last_k, i == n_i - 1))
    def _finalize():
        logits = jnp.dot(z_acc[...], wo_ref[...],
                         preferred_element_type=jnp.float32) + bo_ref[...]
        # mask padded classes so they get zero probability mass
        col = jax.lax.broadcasted_iota(jnp.int32, logits.shape, 1)
        logits = jnp.where(col < num_classes, logits,
                           jnp.float32(jnp.finfo(jnp.float32).min))
        m = jnp.max(logits, axis=-1, keepdims=True)
        e = jnp.exp(logits - m)
        s = jnp.sum(e, axis=-1, keepdims=True)
        out_ref[...] = e / s          # exact divide: runs once, rows sum to 1


@functools.partial(jax.jit, static_argnames=("num_classes",))
def gcnn_forward(a_norm, x, w1, b1, pool, w_out, b_out, *, num_classes):
    n, f = x.shape
    b = pool.shape[0]
    o = w_out.shape[1]

    f_pad = _round_up(f, LANE)
    o_pad = _round_up(o, LANE)
    b_pad = _round_up(b, 8)

    # Tile sizes clamped for tiny graphs; always lane/sublane aligned.
    tile_n = min(TILE_N, _round_up(n, LANE))
    tile_k = min(TILE_K, _round_up(n, LANE))
    n_rows = _round_up(n, tile_n)           # padded Â rows  / P columns
    n_cols = _round_up(n, tile_k)           # padded Â cols  / XW1 rows
    grid = (n_rows // tile_n, n_cols // tile_k)

    # --- operand prep (wrapper) ---------------------------------------------
    # int8 per-tensor quantization of Â (values in [0, 1]); dequant scale is
    # folded into XW1 so the kernel needs no extra rescale.
    a_f32 = a_norm.astype(jnp.float32)
    amax = jnp.maximum(jnp.max(jnp.abs(a_f32)), 1e-12)
    a_scale = amax / 127.0
    a_q = jnp.clip(jnp.round(a_f32 / a_scale), -127.0, 127.0).astype(jnp.int8)
    a_p = jnp.zeros((n_rows, n_cols), jnp.int8).at[:n, :n].set(a_q)

    # X @ W1 hoisted out of the tile loop (same FLOPs once, not per row tile),
    # scaled by the Â dequant scale, cast to bf16 for the MXU.
    xw1 = (x.astype(jnp.float32) @ w1.astype(jnp.float32)) * a_scale
    xw1_p = jnp.zeros((n_cols, f_pad), jnp.bfloat16).at[:n, :f].set(
        xw1.astype(jnp.bfloat16))

    b1_p = jnp.zeros((1, f_pad), jnp.float32).at[:, :f].set(b1)
    p_p = jnp.zeros((b_pad, n_rows), jnp.float32).at[:b, :n].set(pool)
    wo_p = jnp.zeros((f_pad, o_pad), jnp.float32).at[:f, :o].set(w_out)
    bo_p = jnp.zeros((1, o_pad), jnp.float32).at[:, :o].set(b_out)

    # --- VMEM budget (independent of N thanks to K-tiling) -------------------
    vmem_need = (
        2 * tile_n * tile_k * 1          # Â int8 tiles (double-buffered)
        + 2 * tile_k * f_pad * 2         # XW1 bf16 tiles (double-buffered)
        + 2 * b_pad * tile_n * 4         # P column tiles (double-buffered)
        + 8 * f_pad * 4                  # b1 (sublane-padded)
        + f_pad * o_pad * 4              # W_out
        + 8 * o_pad * 4                  # b_out
        + tile_n * f_pad * 4             # AX accumulator scratch
        + b_pad * f_pad * 4              # Z accumulator scratch
        + 2 * b_pad * o_pad * 4          # output
    )
    try:
        vmem_cap = int(getattr(pltpu.get_tpu_info(),
                               "vmem_capacity_bytes", 64 << 20))
    except Exception:                    # conservative fallback (v7x-sized)
        vmem_cap = 64 << 20
    vmem_limit = max(4 * vmem_need, 16 << 20)       # pipelining headroom
    vmem_limit = min(vmem_limit, vmem_cap - (8 << 20))
    vmem_limit = max(vmem_limit, vmem_need + (2 << 20))  # never below footprint
    vmem_limit = int(min(vmem_limit, vmem_cap))

    kernel = functools.partial(gcnn_kernel, num_classes=num_classes)

    out_pad = pl.pallas_call(
        kernel,
        out_shape=jax.ShapeDtypeStruct((b_pad, o_pad), jnp.float32),
        grid_spec=pltpu.PrefetchScalarGridSpec(
            num_scalar_prefetch=0,
            grid=grid,
            in_specs=[
                pl.BlockSpec((tile_n, tile_k), lambda i, k: (i, k)),   # Â (int8)
                pl.BlockSpec((tile_k, f_pad), lambda i, k: (k, 0)),    # XW1 (bf16)
                pl.BlockSpec((1, f_pad), lambda i, k: (0, 0)),         # b1
                pl.BlockSpec((b_pad, tile_n), lambda i, k: (0, i)),    # P col tile
                pl.BlockSpec((f_pad, o_pad), lambda i, k: (0, 0)),     # W_out
                pl.BlockSpec((1, o_pad), lambda i, k: (0, 0)),         # b_out
            ],
            out_specs=pl.BlockSpec((b_pad, o_pad), lambda i, k: (0, 0)),
            scratch_shapes=[
                pltpu.VMEM((tile_n, f_pad), jnp.float32),   # AX accumulator
                pltpu.VMEM((b_pad, f_pad), jnp.float32),    # pooled Z accumulator
            ],
        ),
        compiler_params=pltpu.CompilerParams(
            # both grid axes are reductions (k into AX, i into Z)
            dimension_semantics=("arbitrary", "arbitrary"),
            vmem_limit_bytes=vmem_limit,
        ),
        cost_estimate=pl.CostEstimate(
            flops=(2 * n_rows * n_cols * f_pad
                   + 2 * b_pad * n_rows * f_pad
                   + 2 * b_pad * f_pad * o_pad),
            transcendentals=b_pad * o_pad,
            bytes_accessed=(n_rows * n_cols * 1        # Â int8
                            + n_cols * f_pad * 2       # XW1 bf16
                            + b_pad * n_rows * 4       # P
                            + f_pad * o_pad * 4
                            + b_pad * o_pad * 4),
        ),
    )(a_p, xw1_p, b1_p, p_p, wo_p, bo_p)

    return out_pad[:b, :o]


def build_normalized_adjacency(edge_index, num_nodes):
    """Dense GCN-normalized adjacency:  Â = D̂^{-1/2} (A + I) D̂^{-1/2}."""
    src, dst = edge_index[0], edge_index[1]
    a = jnp.zeros((num_nodes, num_nodes), jnp.float32)
    # message flows src -> dst (row = dst, col = src); duplicates sum like PyG
    a = a.at[dst, src].add(1.0)
    a = a + jnp.eye(num_nodes, dtype=jnp.float32)          # add self loops
    deg = jnp.sum(a, axis=1)
    dinv = jnp.where(deg > 0, 1.0 / jnp.sqrt(deg), 0.0)
    return a * dinv[:, None] * dinv[None, :]


def build_mean_pool_matrix(batch, num_graphs):
    """P[b, n] = 1/|graph b| if node n belongs to graph b else 0."""
    onehot = (batch[None, :] == jnp.arange(num_graphs)[:, None]).astype(jnp.float32)
    counts = jnp.maximum(jnp.sum(onehot, axis=1, keepdims=True), 1.0)
    return onehot / counts


def gcnn_reference(a_norm, x, w1, b1, pool, w_out, b_out):
    """Pure-JAX f32 reference of the forward pass."""
    h = jnp.maximum(a_norm @ (x @ w1) + b1, 0.0)
    z = pool @ h
    logits = z @ w_out + b_out
    return jax.nn.softmax(logits, axis=-1)


if __name__ == "__main__":
    key = jax.random.PRNGKey(0)
    k_x, k_e, k_w1, k_b1, k_wo, k_bo = jax.random.split(key, 6)

    # Small synthetic graph batch: 2 graphs, 16 nodes total, 20 features, 5 classes.
    N = 16            # total nodes
    F_DIM = 20        # num_features
    OUT = 5           # output classes
    B = 2             # number of graphs in the batch
    E = 24            # directed edges (made undirected below)

    prot_x = jax.random.normal(k_x, (N, F_DIM), jnp.float32)

    # random undirected edges
    src = jax.random.randint(k_e, (E,), 0, N)
    dst = jax.random.randint(jax.random.fold_in(k_e, 1), (E,), 0, N)
    edge_index = jnp.stack(
        [jnp.concatenate([src, dst]), jnp.concatenate([dst, src])], axis=0
    )

    # nodes 0..7 -> graph 0, nodes 8..15 -> graph 1
    prot_batch = jnp.concatenate(
        [jnp.zeros((N // 2,), jnp.int32), jnp.ones((N - N // 2,), jnp.int32)]
    )

    # deterministic parameter init (synthetic; no checkpoint load)
    w1 = 0.1 * jax.random.normal(k_w1, (F_DIM, F_DIM), jnp.float32)   # conv1 weight
    b1 = 0.1 * jax.random.normal(k_b1, (1, F_DIM), jnp.float32)       # conv1 bias
    w_out = 0.1 * jax.random.normal(k_wo, (F_DIM, OUT), jnp.float32)  # self.out weight
    b_out = 0.1 * jax.random.normal(k_bo, (1, OUT), jnp.float32)      # self.out bias

    a_norm = build_normalized_adjacency(edge_index, N)
    pool = build_mean_pool_matrix(prot_batch, B)

    out = gcnn_forward(a_norm, prot_x, w1, b1, pool, w_out, b_out, num_classes=OUT)
    jax.block_until_ready(out)

    ref = gcnn_reference(a_norm, prot_x, w1, b1, pool, w_out, b_out)

    assert out.shape == (B, OUT)
    assert bool(jnp.all(jnp.isfinite(out)))
    # softmax rows sum to 1 (exact divide in the finalize step)
    assert bool(jnp.allclose(jnp.sum(out, axis=-1), 1.0, atol=1e-5))
    # matches the pure-JAX f32 reference within bf16 + int8-Â tolerance
    assert bool(jnp.allclose(out, ref, atol=2e-2, rtol=2e-2))

    print("KERNEL_OK")
</pallas_src>

<mosaic_0001>
module attributes {stable_mosaic.version = 11 : i64} {
  func.func @gcnn_kernel(%arg0: i32, %arg1: i32, %arg2: memref<128x128xi8, #tpu.memory_space<vmem>>, %arg3: memref<128x128xbf16, #tpu.memory_space<vmem>>, %arg4: memref<1x128xf32, #tpu.memory_space<vmem>>, %arg5: memref<8x128xf32, #tpu.memory_space<vmem>>, %arg6: memref<128x128xf32, #tpu.memory_space<vmem>>, %arg7: memref<1x128xf32, #tpu.memory_space<vmem>>, %arg8: memref<8x128xf32, #tpu.memory_space<vmem>>, %arg9: memref<128x128xf32, #tpu.memory_space<vmem>>, %arg10: memref<8x128xf32, #tpu.memory_space<vmem>>) attributes {dimension_semantics = [#tpu.dimension_semantics<arbitrary>, #tpu.dimension_semantics<arbitrary>], iteration_bounds = array<i64: 1, 1>, scalar_prefetch = 0 : i64, scratch_operands = 2 : i64, tpu.core_type = #tpu.core_type<tc>, window_params = [{transform_indices = @transform_0, window_bounds = array<i64: 128, 128>}, {transform_indices = @transform_1, window_bounds = array<i64: 128, 128>}, {pipeline_mode = #tpu.pipeline_mode<synchronous>, transform_indices = @transform_2, window_bounds = array<i64: 1, 128>}, {transform_indices = @transform_3, window_bounds = array<i64: 8, 128>}, {pipeline_mode = #tpu.pipeline_mode<synchronous>, transform_indices = @transform_4, window_bounds = array<i64: 128, 128>}, {pipeline_mode = #tpu.pipeline_mode<synchronous>, transform_indices = @transform_5, window_bounds = array<i64: 1, 128>}, {pipeline_mode = #tpu.pipeline_mode<synchronous>, transform_indices = @transform_6, window_bounds = array<i64: 8, 128>}]} {
    %c0_i32 = arith.constant 0 : i32
    %0 = arith.cmpi eq, %arg0, %c0_i32 : i32
    %c0_i32_0 = arith.constant 0 : i32
    %1 = arith.cmpi eq, %arg1, %c0_i32_0 : i32
    %2 = arith.andi %0, %1 : i1
    %3 = arith.extui %2 : i1 to i32
    %c0_i32_1 = arith.constant 0 : i32
    %4 = arith.cmpi ne, %3, %c0_i32_1 : i32
    scf.if %4 {
      %cst_15 = arith.constant 0.000000e+00 : f32
      %23 = vector.broadcast %cst_15 : f32 to vector<8x128xf32>
      %c0_16 = arith.constant 0 : index
      %c0_17 = arith.constant 0 : index
      %24 = vector.load %arg10[%c0_16, %c0_17] : memref<8x128xf32, #tpu.memory_space<vmem>>, vector<8x128xf32>
      tpu.vector_store %arg10[%c0_16, %c0_17], %23 {strides = array<i32>} : memref<8x128xf32, #tpu.memory_space<vmem>>, vector<8x128xf32>,
    } else {
    }
    %c0_i32_2 = arith.constant 0 : i32
    %5 = arith.cmpi eq, %arg1, %c0_i32_2 : i32
    %6 = arith.extui %5 : i1 to i32
    %c0_i32_3 = arith.constant 0 : i32
    %7 = arith.cmpi ne, %6, %c0_i32_3 : i32
    scf.if %7 {
      %cst_15 = arith.constant 0.000000e+00 : f32
      %23 = vector.broadcast %cst_15 : f32 to vector<128x128xf32>
      %c0_16 = arith.constant 0 : index
      %c0_17 = arith.constant 0 : index
      %24 = vector.load %arg9[%c0_16, %c0_17] : memref<128x128xf32, #tpu.memory_space<vmem>>, vector<128x128xf32>
      tpu.vector_store %arg9[%c0_16, %c0_17], %23 {strides = array<i32>} : memref<128x128xf32, #tpu.memory_space<vmem>>, vector<128x128xf32>,
    } else {
    }
    %c0 = arith.constant 0 : index
    %c0_4 = arith.constant 0 : index
    %8 = vector.load %arg2[%c0, %c0_4] : memref<128x128xi8, #tpu.memory_space<vmem>>, vector<128x128xi8>
    %9 = arith.sitofp %8 : vector<128x128xi8> to vector<128x128xf32>
    %10 = arith.truncf %9 : vector<128x128xf32> to vector<128x128xbf16>
    %c0_5 = arith.constant 0 : index
    %c0_6 = arith.constant 0 : index
    %11 = vector.load %arg9[%c0_5, %c0_6] : memref<128x128xf32, #tpu.memory_space<vmem>>, vector<128x128xf32>
    %c0_7 = arith.constant 0 : index
    %c0_8 = arith.constant 0 : index
    %12 = vector.load %arg3[%c0_7, %c0_8] : memref<128x128xbf16, #tpu.memory_space<vmem>>, vector<128x128xbf16>
    %cst = arith.constant dense<0.000000e+00> : vector<128x128xf32>
    %13 = tpu.matmul %10, %12, %cst {dimension_numbers = #tpu.dot_dimension_numbers<[1], [0], [0], [1], [0, 0, 1, 1], [], []>} : vector<128x128xbf16>, vector<128x128xbf16>, vector<128x128xf32> -> vector<128x128xf32>
    %14 = arith.addf %11, %13 : vector<128x128xf32>
    %c0_9 = arith.constant 0 : index
    %c0_10 = arith.constant 0 : index
    %15 = vector.load %arg9[%c0_9, %c0_10] : memref<128x128xf32, #tpu.memory_space<vmem>>, vector<128x128xf32>
    tpu.vector_store %arg9[%c0_9, %c0_10], %14 {strides = array<i32>} : memref<128x128xf32, #tpu.memory_space<vmem>>, vector<128x128xf32>,
    %c0_i32_11 = arith.constant 0 : i32
    %16 = arith.cmpi eq, %arg1, %c0_i32_11 : i32
    %17 = arith.extui %16 : i1 to i32
    %c0_i32_12 = arith.constant 0 : i32
    %18 = arith.cmpi ne, %17, %c0_i32_12 : i32
    scf.if %18 {
      %c0_15 = arith.constant 0 : index
      %c0_16 = arith.constant 0 : index
      %23 = vector.load %arg9[%c0_15, %c0_16] : memref<128x128xf32, #tpu.memory_space<vmem>>, vector<128x128xf32>
      %c0_17 = arith.constant 0 : index
      %c0_18 = arith.constant 0 : index
      %24 = vector.load %arg4[%c0_17, %c0_18] : memref<1x128xf32, #tpu.memory_space<vmem>>, vector<1x128xf32>
      %25 = vector.broadcast %24 : vector<1x128xf32> to vector<128x128xf32>
      %26 = arith.addf %23, %25 : vector<128x128xf32>
      %cst_19 = arith.constant 0.000000e+00 : f32
      %27 = vector.broadcast %cst_19 : f32 to vector<128x128xf32>
      %28 = arith.maximumf %26, %27 : vector<128x128xf32>
      %c0_20 = arith.constant 0 : index
      %c0_21 = arith.constant 0 : index
      %29 = vector.load %arg10[%c0_20, %c0_21] : memref<8x128xf32, #tpu.memory_space<vmem>>, vector<8x128xf32>
      %c0_22 = arith.constant 0 : index
      %c0_23 = arith.constant 0 : index
      %30 = vector.load %arg5[%c0_22, %c0_23] : memref<8x128xf32, #tpu.memory_space<vmem>>, vector<8x128xf32>
      %cst_24 = arith.constant dense<0.000000e+00> : vector<8x128xf32>
      %31 = tpu.matmul %30, %28, %cst_24 {dimension_numbers = #tpu.dot_dimension_numbers<[1], [0], [0], [1], [0, 0, 1, 1], [], []>} : vector<8x128xf32>, vector<128x128xf32>, vector<8x128xf32> -> vector<8x128xf32>
      %32 = arith.addf %29, %31 : vector<8x128xf32>
      %c0_25 = arith.constant 0 : index
      %c0_26 = arith.constant 0 : index
      %33 = vector.load %arg10[%c0_25, %c0_26] : memref<8x128xf32, #tpu.memory_space<vmem>>, vector<8x128xf32>
      tpu.vector_store %arg10[%c0_25, %c0_26], %32 {strides = array<i32>} : memref<8x128xf32, #tpu.memory_space<vmem>>, vector<8x128xf32>,
    } else {
    }
    %c0_i32_13 = arith.constant 0 : i32
    %19 = arith.cmpi eq, %arg0, %c0_i32_13 : i32
    %20 = arith.andi %16, %19 : i1
    %21 = arith.extui %20 : i1 to i32
    %c0_i32_14 = arith.constant 0 : i32
    %22 = arith.cmpi ne, %21, %c0_i32_14 : i32
    scf.if %22 {
      %c0_15 = arith.constant 0 : index
      %c0_16 = arith.constant 0 : index
      %23 = vector.load %arg10[%c0_15, %c0_16] : memref<8x128xf32, #tpu.memory_space<vmem>>, vector<8x128xf32>
      %c0_17 = arith.constant 0 : index
      %c0_18 = arith.constant 0 : index
      %24 = vector.load %arg6[%c0_17, %c0_18] : memref<128x128xf32, #tpu.memory_space<vmem>>, vector<128x128xf32>
      %cst_19 = arith.constant dense<0.000000e+00> : vector<8x128xf32>
      %25 = tpu.matmul %23, %24, %cst_19 {dimension_numbers = #tpu.dot_dimension_numbers<[1], [0], [0], [1], [0, 0, 1, 1], [], []>} : vector<8x128xf32>, vector<128x128xf32>, vector<8x128xf32> -> vector<8x128xf32>
      %c0_20 = arith.constant 0 : index
      %c0_21 = arith.constant 0 : index
      %26 = vector.load %arg7[%c0_20, %c0_21] : memref<1x128xf32, #tpu.memory_space<vmem>>, vector<1x128xf32>
      %27 = vector.broadcast %26 : vector<1x128xf32> to vector<8x128xf32>
      %28 = arith.addf %25, %27 : vector<8x128xf32>
      %29 = tpu.iota {dimensions = array<i32: 1>} : vector<8x128xi32>
      %c5_i32 = arith.constant 5 : i32
      %30 = vector.broadcast %c5_i32 : i32 to vector<8x128xi32>
      %31 = arith.cmpi slt, %29, %30 : vector<8x128xi32>
      %cst_22 = arith.constant -3.40282347E+38 : f32
      %32 = vector.broadcast %cst_22 : f32 to vector<8x128xf32>
      %33 = arith.select %31, %28, %32 : vector<8x128xi1>, vector<8x128xf32>
      %cst_23 = arith.constant dense<0xFF800000> : vector<8xf32>
      %34 = vector.multi_reduction <maximumf>, %33, %cst_23 [1] : vector<8x128xf32> to vector<8xf32>
      %35 = vector.shape_cast %34 : vector<8xf32> to vector<8x1xf32>
      %36 = vector.broadcast %35 : vector<8x1xf32> to vector<8x128xf32>
      %37 = arith.subf %33, %36 : vector<8x128xf32>
      %38 = math.exp %37 : vector<8x128xf32>
      %cst_24 = arith.constant dense<0.000000e+00> : vector<8xf32>
      %39 = vector.multi_reduction <add>, %38, %cst_24 [1] : vector<8x128xf32> to vector<8xf32>
      %40 = vector.shape_cast %39 : vector<8xf32> to vector<8x1xf32>
      %41 = vector.broadcast %40 : vector<8x1xf32> to vector<8x128xf32>
      %42 = arith.divf %38, %41 : vector<8x128xf32>
      %c0_25 = arith.constant 0 : index
      %c0_26 = arith.constant 0 : index
      %43 = vector.load %arg8[%c0_25, %c0_26] : memref<8x128xf32, #tpu.memory_space<vmem>>, vector<8x128xf32>
      tpu.vector_store %arg8[%c0_25, %c0_26], %42 {strides = array<i32>} : memref<8x128xf32, #tpu.memory_space<vmem>>, vector<8x128xf32>,
    } else {
    }
    return
  }
  func.func @transform_0(%arg0: i32, %arg1: i32) -> (i32, i32) {
    %c0_i32 = arith.constant 0 : i32
    return %arg0, %arg1 : i32, i32
  }
  func.func @transform_1(%arg0: i32, %arg1: i32) -> (i32, i32) {
    %c0_i32 = arith.constant 0 : i32
    %c0_i32_0 = arith.constant 0 : i32
    return %arg1, %c0_i32 : i32, i32
  }
  func.func @transform_2(%arg0: i32, %arg1: i32) -> (i32, i32) {
    %c0_i32 = arith.constant 0 : i32
    %c0_i32_0 = arith.constant 0 : i32
    %c0_i32_1 = arith.constant 0 : i32
    return %c0_i32, %c0_i32_0 : i32, i32
  }
  func.func @transform_3(%arg0: i32, %arg1: i32) -> (i32, i32) {
    %c0_i32 = arith.constant 0 : i32
    %c0_i32_0 = arith.constant 0 : i32
    return %c0_i32, %arg0 : i32, i32
  }
  func.func @transform_4(%arg0: i32, %arg1: i32) -> (i32, i32) {
    %c0_i32 = arith.constant 0 : i32
    %c0_i32_0 = arith.constant 0 : i32
    %c0_i32_1 = arith.constant 0 : i32
    return %c0_i32, %c0_i32_0 : i32, i32
  }
  func.func @transform_5(%arg0: i32, %arg1: i32) -> (i32, i32) {
    %c0_i32 = arith.constant 0 : i32
    %c0_i32_0 = arith.constant 0 : i32
    %c0_i32_1 = arith.constant 0 : i32
    return %c0_i32, %c0_i32_0 : i32, i32
  }
  func.func @transform_6(%arg0: i32, %arg1: i32) -> (i32, i32) {
    %c0_i32 = arith.constant 0 : i32
    %c0_i32_0 = arith.constant 0 : i32
    %c0_i32_1 = arith.constant 0 : i32
    return %c0_i32, %c0_i32_0 : i32, i32
  }
}

</mosaic_0001>

<llo_original>
// kernel: gcnn_forward.1
$region0: #{gcnn_forward.1}
  #allocation0 [shape = 'u32[]', space=smem, size = 0x4, offset = 0x4, fixed_abs, tag = 'smem constant byte address 0x4 - core index']
  #allocation1 [shape = 'u32[144,128]{1,0:T(1,128)}', space=vmem, size = 0x12000, scoped, tag = 'internal scratch']
  #allocation2 [shape = 'f32[128,128]{1,0:T(8,128)}', space=vmem, size = 0x10000, scoped, tag = 'scratch operand']
  #allocation3 [shape = 'f32[8,128]{1,0:T(8,128)}', space=vmem, size = 0x1000, scoped, tag = 'scratch operand']
  %s0 = inlined_call_operand.vmem [shape: s8[128,128], index: 0, kind: input, shape index: {}]
  %s1 = inlined_call_operand.vmem [shape: bf16[128,128], index: 1, kind: input, shape index: {}]
  %s2 = inlined_call_operand.vmem [shape: f32[1,128], index: 2, kind: input, shape index: {}]
  %s3 = inlined_call_operand.vmem [shape: f32[8,128], index: 3, kind: input, shape index: {}]
  %s4 = inlined_call_operand.vmem [shape: f32[128,128], index: 4, kind: input, shape index: {}]
  %s5 = inlined_call_operand.vmem [shape: f32[1,128], index: 5, kind: input, shape index: {}]
  %s6 = inlined_call_operand.vmem [shape: f32[8,128], index: 6, kind: output, shape index: {}]
  %s7 = sld [smem:[#allocation0]]
  $region50: #{gcnn_forward.1} parent=0
    _
  %s9 = ssub.s32 1, %s7
  %s10 = scalar_select 0, %s9, %s7
  // Predicated region
  $region2: #{gcnn_forward.1} parent=0 // pred_check
    _
  $region3: #{gcnn_forward.1} parent=0 // pred_check_branch
    %12 = sbr.rel (0) target = $region5
  $region4: #{gcnn_forward.1} parent=0 // pred_region
    _
  $region5: #{gcnn_forward.1} parent=0 // pred_fallthru
    _
  // Predicated region
  $region6: #{gcnn_forward.1} parent=0 // pred_check
    _
  $region7: #{gcnn_forward.1} parent=0 // pred_check_branch
    %14 = sbr.rel (0) target = $region9
  $region8: #{gcnn_forward.1} parent=0 // pred_region
    _
  $region9: #{gcnn_forward.1} parent=0 // pred_fallthru
    _
  // Predicated region
  $region10: #{gcnn_forward.1} parent=0 // pred_check
    _
  $region11: #{gcnn_forward.1} parent=0 // pred_check_branch
    %16 = sbr.rel (0) target = $region13
  $region12: #{gcnn_forward.1} parent=0 // pred_region
    _
  $region13: #{gcnn_forward.1} parent=0 // pred_fallthru
    _
  // Predicated region
  $region14: #{gcnn_forward.1} parent=0 // pred_check
    _
  $region15: #{gcnn_forward.1} parent=0 // pred_check_branch
    %18 = sbr.rel (0) target = $region17
  $region16: #{gcnn_forward.1} parent=0 // pred_region
    _
  $region17: #{gcnn_forward.1} parent=0 // pred_fallthru
    _
  // Predicated region
  $region18: #{gcnn_forward.1} parent=0 // pred_check
    _
  $region19: #{gcnn_forward.1} parent=0 // pred_check_branch
    %20 = sbr.rel (0) target = $region21
  $region20: #{gcnn_forward.1} parent=0 // pred_region
    _
  $region21: #{gcnn_forward.1} parent=0 // pred_fallthru
    _
  // Predicated region
  $region22: #{gcnn_forward.1} parent=0 // pred_check
    _
  $region23: #{gcnn_forward.1} parent=0 // pred_check_branch
    %22 = sbr.rel (0) target = $region25
  $region24: #{gcnn_forward.1} parent=0 // pred_region
    _
  $region25: #{gcnn_forward.1} parent=0 // pred_fallthru
    _
  %p24 = scmp.eq.s32.totalorder 0, 0
  %p25 = scmp.eq.s32.totalorder 0, 0
  %p26 = pnand %p24, %p25
  %p27 = pneg %p26
  // Predicated region
  $region26: #{gcnn_forward.1} parent=0 // pred_check
    _
  $region27: #{gcnn_forward.1} parent=0 // pred_check_branch
    %29 = sbr.rel (%p26) target = $region29
  $region28: #{gcnn_forward.1} parent=0 // pred_region
    %30 = vst [vmem:[#allocation3] sm:$0xff] 0.0
  $region29: #{gcnn_forward.1} parent=0 // pred_fallthru
    _
  // Predicated region
  $region30: #{gcnn_forward.1} parent=0 // pred_check
    %p31 = pneg %p25
  $region31: #{gcnn_forward.1} parent=0 // pred_check_branch
    %33 = sbr.rel (%p31) target = $region33
  $region32: #{gcnn_forward.1} parent=0 // pred_region
    %34 = vst [vmem:[#allocation2] sm:$0xff] 0.0
    %35 = vst [vmem:[#allocation2 + $0x8] sm:$0xff] 0.0
    %36 = vst [vmem:[#allocation2 + $0x10] sm:$0xff] 0.0
    %37 = vst [vmem:[#allocation2 + $0x18] sm:$0xff] 0.0
    %38 = vst [vmem:[#allocation2 + $0x20] sm:$0xff] 0.0
    %39 = vst [vmem:[#allocation2 + $0x28] sm:$0xff] 0.0
    %40 = vst [vmem:[#allocation2 + $0x30] sm:$0xff] 0.0
    %41 = vst [vmem:[#allocation2 + $0x38] sm:$0xff] 0.0
    %42 = vst [vmem:[#allocation2 + $0x40] sm:$0xff] 0.0
    %43 = vst [vmem:[#allocation2 + $0x48] sm:$0xff] 0.0
    %44 = vst [vmem:[#allocation2 + $0x50] sm:$0xff] 0.0
    %45 = vst [vmem:[#allocation2 + $0x58] sm:$0xff] 0.0
    %46 = vst [vmem:[#allocation2 + $0x60] sm:$0xff] 0.0
    %47 = vst [vmem:[#allocation2 + $0x68] sm:$0xff] 0.0
    %48 = vst [vmem:[#allocation2 + $0x70] sm:$0xff] 0.0
    %49 = vst [vmem:[#allocation2 + $0x78] sm:$0xff] 0.0
  $region33: #{gcnn_forward.1} parent=0 // pred_fallthru
    _
  %v50 = vld [vmem:[%s0] sm:$0xff]
  %v51 = vld [vmem:[%s0 + $0x8] sm:$0xff]
  %v52 = vld [vmem:[%s0 + $0x10] sm:$0xff]
  %v53 = vld [vmem:[%s0 + $0x18] sm:$0xff]
  %v54 = vunpack.c.l.s8.bf16 %v50
  %v55 = vunpack.c.h.s8.bf16 %v50
  %v56 = vunpack.c.l.s8.bf16 %v51
  %v57 = vunpack.c.h.s8.bf16 %v51
  %v58 = vunpack.c.l.s8.bf16 %v52
  %v59 = vunpack.c.h.s8.bf16 %v52
  %v60 = vunpack.c.l.s8.bf16 %v53
  %v61 = vunpack.c.h.s8.bf16 %v53
  %v62 = vld [vmem:[#allocation2] sm:$0xff]
  %v63 = vld [vmem:[#allocation2 + $0x8] sm:$0xff]
  %v64 = vld [vmem:[#allocation2 + $0x10] sm:$0xff]
  %v65 = vld [vmem:[#allocation2 + $0x18] sm:$0xff]
  %v66 = vld [vmem:[#allocation2 + $0x20] sm:$0xff]
  %v67 = vld [vmem:[#allocation2 + $0x28] sm:$0xff]
  %v68 = vld [vmem:[#allocation2 + $0x30] sm:$0xff]
  %v69 = vld [vmem:[#allocation2 + $0x38] sm:$0xff]
  %v70 = vld [vmem:[#allocation2 + $0x40] sm:$0xff]
  %v71 = vld [vmem:[#allocation2 + $0x48] sm:$0xff]
  %v72 = vld [vmem:[#allocation2 + $0x50] sm:$0xff]
  %v73 = vld [vmem:[#allocation2 + $0x58] sm:$0xff]
  %v74 = vld [vmem:[#allocation2 + $0x60] sm:$0xff]
  %v75 = vld [vmem:[#allocation2 + $0x68] sm:$0xff]
  %v76 = vld [vmem:[#allocation2 + $0x70] sm:$0xff]
  %v77 = vld [vmem:[#allocation2 + $0x78] sm:$0xff]
  %v78 = vld [vmem:[%s1] sm:$0xf]
  %v79 = vld [vmem:[%s1 + $0x4] sm:$0xf]
  %v80 = vld [vmem:[%s1 + $0x8] sm:$0xf]
  %v81 = vld [vmem:[%s1 + $0xc] sm:$0xf]
  %v82 = vld [vmem:[%s1 + $0x10] sm:$0xf]
  %v83 = vld [vmem:[%s1 + $0x14] sm:$0xf]
  %v84 = vld [vmem:[%s1 + $0x18] sm:$0xf]
  %v85 = vld [vmem:[%s1 + $0x1c] sm:$0xf]
  %v86 = vld [vmem:[%s1 + $0x20] sm:$0xf]
  %v87 = vld [vmem:[%s1 + $0x24] sm:$0xf]
  %v88 = vld [vmem:[%s1 + $0x28] sm:$0xf]
  %v89 = vld [vmem:[%s1 + $0x2c] sm:$0xf]
  %v90 = vld [vmem:[%s1 + $0x30] sm:$0xf]
  %v91 = vld [vmem:[%s1 + $0x34] sm:$0xf]
  %v92 = vld [vmem:[%s1 + $0x38] sm:$0xf]
  %v93 = vld [vmem:[%s1 + $0x3c] sm:$0xf]
  %v110 = vunpack.c.l.b16 %v78
  %v111 = vunpack.c.l.b16 %v79
  %v112 = vunpack.c.l.b16 %v80
  %v113 = vunpack.c.l.b16 %v81
  %v114 = vunpack.c.l.b16 %v82
  %v115 = vunpack.c.l.b16 %v83
  %v116 = vunpack.c.l.b16 %v84
  %v117 = vunpack.c.l.b16 %v85
  %v118 = vunpack.c.l.b16 %v86
  %v119 = vunpack.c.l.b16 %v87
  %v120 = vunpack.c.l.b16 %v88
  %v121 = vunpack.c.l.b16 %v89
  %v122 = vunpack.c.l.b16 %v90
  %v123 = vunpack.c.l.b16 %v91
  %v124 = vunpack.c.l.b16 %v92
  %v125 = vunpack.c.l.b16 %v93
  %v126 = vpack.c.b16 %v111, %v110
  %v127 = vpack.c.b16 %v113, %v112
  %v128 = vpack.c.b16 %v115, %v114
  %v129 = vpack.c.b16 %v117, %v116
  %v130 = vpack.c.b16 %v119, %v118
  %v131 = vpack.c.b16 %v121, %v120
  %v132 = vpack.c.b16 %v123, %v122
  %v133 = vpack.c.b16 %v125, %v124
  %142 = vmatprep.subr.bf16.mxu0 0
  %143 = vmatpush1.bf16.msra.mxu0 %v126
  %144 = vmatprep.subr.bf16.mxu0 0
  %145 = vmatpush1.bf16.msra.mxu0 %v127
  %146 = vmatprep.subr.bf16.mxu0 0
  %147 = vmatpush1.bf16.msra.mxu0 %v128
  %148 = vmatprep.subr.bf16.mxu0 0
  %149 = vmatpush1.bf16.msra.mxu0 %v129
  %150 = vmatprep.subr.bf16.mxu0 0
  %151 = vmatpush1.bf16.msra.mxu0 %v130
  %152 = vmatprep.subr.bf16.mxu0 0
  %153 = vmatpush1.bf16.msra.mxu0 %v131
  %154 = vmatprep.subr.bf16.mxu0 0
  %155 = vmatpush1.bf16.msra.mxu0 %v132
  %156 = vmatprep.subr.bf16.mxu0 0
  %157 = vmatpush1.bf16.msra.mxu0 %v133
  %158 = vmatprep.subr.bf16.mxu0 0
  %159 = vmatpush1.bf16.msra.mxu0 0
  %160 = vmatprep.subr.bf16.mxu0 0
  %161 = vmatpush1.bf16.msra.mxu0 0
  %162 = vmatprep.subr.bf16.mxu0 0
  %163 = vmatpush1.bf16.msra.mxu0 0
  %164 = vmatprep.subr.bf16.mxu0 0
  %165 = vmatpush1.bf16.msra.mxu0 0
  %166 = vmatprep.subr.bf16.mxu0 0
  %167 = vmatpush1.bf16.msra.mxu0 0
  %168 = vmatprep.subr.bf16.mxu0 0
  %169 = vmatpush1.bf16.msra.mxu0 0
  %170 = vmatprep.subr.bf16.mxu0 0
  %171 = vmatpush1.bf16.msra.mxu0 0
  %172 = vmatprep.subr.bf16.mxu0 0
  %173 = vmatpush1.bf16.msra.mxu0 0
  %174 = vmatprep.mubr.bf16.mxu0 0
  %175 = vmatmul.mubr.bf16.gmra.mrb[0].mxu0 %v54
  %v176 = vpop.f32.mrb[0].mxu0
  %v177 = vadd.f32 0.0, %v176
  %v178 = vpop.f32.mrb[0].mxu0
  %v179 = vpop.f32.mrb[0].mxu0
  %v180 = vadd.f32 0.0, %v179
  %v181 = vpop.f32.mrb[0].mxu0
  %182 = vmatprep.mubr.bf16.mxu0 0
  %183 = vmatmul.mubr.bf16.gmra.mrb[0].mxu0 %v55
  %v184 = vpop.f32.mrb[0].mxu0
  %v185 = vadd.f32 0.0, %v184
  %v186 = vpop.f32.mrb[0].mxu0
  %v187 = vpop.f32.mrb[0].mxu0
  %v188 = vadd.f32 0.0, %v187
  %v189 = vpop.f32.mrb[0].mxu0
  %190 = vmatprep.mubr.bf16.mxu0 0
  %191 = vmatmul.mubr.bf16.gmra.mrb[0].mxu0 %v56
  %v192 = vpop.f32.mrb[0].mxu0
  %v193 = vadd.f32 0.0, %v192
  %v194 = vpop.f32.mrb[0].mxu0
  %v195 = vpop.f32.mrb[0].mxu0
  %v196 = vadd.f32 0.0, %v195
  %v197 = vpop.f32.mrb[0].mxu0
  %198 = vmatprep.mubr.bf16.mxu0 0
  %199 = vmatmul.mubr.bf16.gmra.mrb[0].mxu0 %v57
  %v200 = vpop.f32.mrb[0].mxu0
  %v201 = vadd.f32 0.0, %v200
  %v202 = vpop.f32.mrb[0].mxu0
  %v203 = vpop.f32.mrb[0].mxu0
  %v204 = vadd.f32 0.0, %v203
  %v205 = vpop.f32.mrb[0].mxu0
  %206 = vmatprep.mubr.bf16.mxu0 0
  %207 = vmatmul.mubr.bf16.gmra.mrb[0].mxu0 %v58
  %v208 = vpop.f32.mrb[0].mxu0
  %v209 = vadd.f32 0.0, %v208
  %v210 = vpop.f32.mrb[0].mxu0
  %v211 = vpop.f32.mrb[0].mxu0
  %v212 = vadd.f32 0.0, %v211
  %v213 = vpop.f32.mrb[0].mxu0
  %214 = vmatprep.mubr.bf16.mxu0 0
  %215 = vmatmul.mubr.bf16.gmra.mrb[0].mxu0 %v59
  %v216 = vpop.f32.mrb[0].mxu0
  %v217 = vadd.f32 0.0, %v216
  %v218 = vpop.f32.mrb[0].mxu0
  %v219 = vpop.f32.mrb[0].mxu0
  %v220 = vadd.f32 0.0, %v219
  %v221 = vpop.f32.mrb[0].mxu0
  %222 = vmatprep.mubr.bf16.mxu0 0
  %223 = vmatmul.mubr.bf16.gmra.mrb[0].mxu0 %v60
  %v224 = vpop.f32.mrb[0].mxu0
  %v225 = vadd.f32 0.0, %v224
  %v226 = vpop.f32.mrb[0].mxu0
  %v227 = vpop.f32.mrb[0].mxu0
  %v228 = vadd.f32 0.0, %v227
  %v229 = vpop.f32.mrb[0].mxu0
  %230 = vmatprep.mubr.bf16.mxu0 0
  %231 = vmatmul.mubr.bf16.gmra.mrb[0].mxu0 %v61
  %v232 = vpop.f32.mrb[0].mxu0
  %v233 = vadd.f32 0.0, %v232
  %v234 = vpop.f32.mrb[0].mxu0
  %v235 = vpop.f32.mrb[0].mxu0
  %v236 = vadd.f32 0.0, %v235
  %v237 = vpop.f32.mrb[0].mxu0
  %238 = vdwg.mxu0
  %v239 = vadd.f32 %v62, %v177
  %v240 = vadd.f32 %v63, %v180
  %v241 = vadd.f32 %v64, %v185
  %v242 = vadd.f32 %v65, %v188
  %v243 = vadd.f32 %v66, %v193
  %v244 = vadd.f32 %v67, %v196
  %v245 = vadd.f32 %v68, %v201
  %v246 = vadd.f32 %v69, %v204
  %v247 = vadd.f32 %v70, %v209
  %v248 = vadd.f32 %v71, %v212
  %v249 = vadd.f32 %v72, %v217
  %v250 = vadd.f32 %v73, %v220
  %v251 = vadd.f32 %v74, %v225
  %v252 = vadd.f32 %v75, %v228
  %v253 = vadd.f32 %v76, %v233
  %v254 = vadd.f32 %v77, %v236
  %255 = vst [vmem:[#allocation2] sm:$0xff] %v239
  %256 = vst [vmem:[#allocation2 + $0x8] sm:$0xff] %v240
  %257 = vst [vmem:[#allocation2 + $0x10] sm:$0xff] %v241
  %258 = vst [vmem:[#allocation2 + $0x18] sm:$0xff] %v242
  %259 = vst [vmem:[#allocation2 + $0x20] sm:$0xff] %v243
  %260 = vst [vmem:[#allocation2 + $0x28] sm:$0xff] %v244
  %261 = vst [vmem:[#allocation2 + $0x30] sm:$0xff] %v245
  %262 = vst [vmem:[#allocation2 + $0x38] sm:$0xff] %v246
  %263 = vst [vmem:[#allocation2 + $0x40] sm:$0xff] %v247
  %264 = vst [vmem:[#allocation2 + $0x48] sm:$0xff] %v248
  %265 = vst [vmem:[#allocation2 + $0x50] sm:$0xff] %v249
  %266 = vst [vmem:[#allocation2 + $0x58] sm:$0xff] %v250
  %267 = vst [vmem:[#allocation2 + $0x60] sm:$0xff] %v251
  %268 = vst [vmem:[#allocation2 + $0x68] sm:$0xff] %v252
  %269 = vst [vmem:[#allocation2 + $0x70] sm:$0xff] %v253
  %270 = vst [vmem:[#allocation2 + $0x78] sm:$0xff] %v254
  // Predicated region
  $region34: #{gcnn_forward.1} parent=0 // pred_check
    %p271 = pneg %p25
  $region35: #{gcnn_forward.1} parent=0 // pred_check_branch
    %273 = sbr.rel (%p271) target = $region37
  $region36: #{gcnn_forward.1} parent=0 // pred_region
    %v274 = vld [vmem:[#allocation2] sm:$0xff]
    %v275 = vld [vmem:[#allocation2 + $0x8] sm:$0xff]
    %v276 = vld [vmem:[#allocation2 + $0x10] sm:$0xff]
    %v277 = vld [vmem:[#allocation2 + $0x18] sm:$0xff]
    %v278 = vld [vmem:[#allocation2 + $0x20] sm:$0xff]
    %v279 = vld [vmem:[#allocation2 + $0x28] sm:$0xff]
    %v280 = vld [vmem:[#allocation2 + $0x30] sm:$0xff]
    %v281 = vld [vmem:[#allocation2 + $0x38] sm:$0xff]
    %v282 = vld [vmem:[#allocation2 + $0x40] sm:$0xff]
    %v283 = vld [vmem:[#allocation2 + $0x48] sm:$0xff]
    %v284 = vld [vmem:[#allocation2 + $0x50] sm:$0xff]
    %v285 = vld [vmem:[#allocation2 + $0x58] sm:$0xff]
    %v286 = vld [vmem:[#allocation2 + $0x60] sm:$0xff]
    %v287 = vld [vmem:[#allocation2 + $0x68] sm:$0xff]
    %v288 = vld [vmem:[#allocation2 + $0x70] sm:$0xff]
    %v289 = vld [vmem:[#allocation2 + $0x78] sm:$0xff]
    %v290 = vld [vmem:[%s2] sm:$0x1]
    %v292 = vlaneseq
    %v293 = vshrl.u32 %v292, 7
    %v294 = vsub.s32 0, %v293
    %v295 = vrot.slane %v290, %v294
    %v297 = vadd.f32 %v274, %v295
    %v298 = vadd.f32 %v275, %v295
    %v299 = vadd.f32 %v276, %v295
    %v300 = vadd.f32 %v277, %v295
    %v301 = vadd.f32 %v278, %v295
    %v302 = vadd.f32 %v279, %v295
    %v303 = vadd.f32 %v280, %v295
    %v304 = vadd.f32 %v281, %v295
    %v305 = vadd.f32 %v282, %v295
    %v306 = vadd.f32 %v283, %v295
    %v307 = vadd.f32 %v284, %v295
    %v308 = vadd.f32 %v285, %v295
    %v309 = vadd.f32 %v286, %v295
    %v310 = vadd.f32 %v287, %v295
    %v311 = vadd.f32 %v288, %v295
    %v312 = vadd.f32 %v289, %v295
    %v313 = vmax.f32 %v297, 0.0
    %v314 = vmax.f32 %v298, 0.0
    %v315 = vmax.f32 %v299, 0.0
    %v316 = vmax.f32 %v300, 0.0
    %v317 = vmax.f32 %v301, 0.0
    %v318 = vmax.f32 %v302, 0.0
    %v319 = vmax.f32 %v303, 0.0
    %v320 = vmax.f32 %v304, 0.0
    %v321 = vmax.f32 %v305, 0.0
    %v322 = vmax.f32 %v306, 0.0
    %v323 = vmax.f32 %v307, 0.0
    %v324 = vmax.f32 %v308, 0.0
    %v325 = vmax.f32 %v309, 0.0
    %v326 = vmax.f32 %v310, 0.0
    %v327 = vmax.f32 %v311, 0.0
    %v328 = vmax.f32 %v312, 0.0
    %v329 = vld [vmem:[#allocation3] sm:$0xff]
    %v330 = vld [vmem:[%s3] sm:$0xff]
    %331 = vmatprep.subr.mxu0 0.0
    %332 = vmatpush1.msra.mxu0 %v313
    %333 = vmatprep.subr.mxu0 0.0
    %334 = vmatpush1.msra.mxu0 %v314
    %335 = vmatprep.subr.mxu0 0.0
    %336 = vmatpush1.msra.mxu0 %v315
    %337 = vmatprep.subr.mxu0 0.0
    %338 = vmatpush1.msra.mxu0 %v316
    %339 = vmatprep.subr.mxu0 0.0
    %340 = vmatpush1.msra.mxu0 %v317
    %341 = vmatprep.subr.mxu0 0.0
    %342 = vmatpush1.msra.mxu0 %v318
    %343 = vmatprep.subr.mxu0 0.0
    %344 = vmatpush1.msra.mxu0 %v319
    %345 = vmatprep.subr.mxu0 0.0
    %346 = vmatpush1.msra.mxu0 %v320
    %347 = vmatprep.subr.mxu0 0.0
    %348 = vmatpush1.msra.mxu0 %v321
    %349 = vmatprep.subr.mxu0 0.0
    %350 = vmatpush1.msra.mxu0 %v322
    %351 = vmatprep.subr.mxu0 0.0
    %352 = vmatpush1.msra.mxu0 %v323
    %353 = vmatprep.subr.mxu0 0.0
    %354 = vmatpush1.msra.mxu0 %v324
    %355 = vmatprep.subr.mxu0 0.0
    %356 = vmatpush1.msra.mxu0 %v325
    %357 = vmatprep.subr.mxu0 0.0
    %358 = vmatpush1.msra.mxu0 %v326
    %359 = vmatprep.subr.mxu0 0.0
    %360 = vmatpush1.msra.mxu0 %v327
    %361 = vmatprep.subr.mxu0 0.0
    %362 = vmatpush1.msra.mxu0 %v328
    %363 = vmatprep.subr.mxu0 0.0
    %364 = vmatpush1.msra.mxu0 0.0
    %365 = vmatprep.subr.mxu0 0.0
    %366 = vmatpush1.msra.mxu0 0.0
    %367 = vmatprep.subr.mxu0 0.0
    %368 = vmatpush1.msra.mxu0 0.0
    %369 = vmatprep.subr.mxu0 0.0
    %370 = vmatpush1.msra.mxu0 0.0
    %371 = vmatprep.subr.mxu0 0.0
    %372 = vmatpush1.msra.mxu0 0.0
    %373 = vmatprep.subr.mxu0 0.0
    %374 = vmatpush1.msra.mxu0 0.0
    %375 = vmatprep.subr.mxu0 0.0
    %376 = vmatpush1.msra.mxu0 0.0
    %377 = vmatprep.subr.mxu0 0.0
    %378 = vmatpush1.msra.mxu0 0.0
    %379 = vmatprep.subr.mxu0 0.0
    %380 = vmatpush1.msra.mxu0 0.0
    %381 = vmatprep.subr.mxu0 0.0
    %382 = vmatpush1.msra.mxu0 0.0
    %383 = vmatprep.subr.mxu0 0.0
    %384 = vmatpush1.msra.mxu0 0.0
    %385 = vmatprep.subr.mxu0 0.0
    %386 = vmatpush1.msra.mxu0 0.0
    %387 = vmatprep.subr.mxu0 0.0
    %388 = vmatpush1.msra.mxu0 0.0
    %389 = vmatprep.subr.mxu0 0.0
    %390 = vmatpush1.msra.mxu0 0.0
    %391 = vmatprep.subr.mxu0 0.0
    %392 = vmatpush1.msra.mxu0 0.0
    %393 = vmatprep.subr.mxu0 0.0
    %394 = vmatpush1.msra.mxu0 0.0
    %395 = vmatprep.mubr.f32.mxu0 0.0
    %396 = vmatmul.mubr.f32.gmra.mrb[0].mxu0 %v330
    %v397 = vpop.f32.mrb[0].mxu0
    %v398 = vadd.f32 0.0, %v397
    %v399 = vpop.f32.mrb[0].mxu0
    %400 = vdwg.mxu0
    %v401 = vadd.f32 %v329, %v398
    %402 = vst [vmem:[#allocation3] sm:$0xff] %v401
  $region37: #{gcnn_forward.1} parent=0 // pred_fallthru
    _
  // Predicated region
  $region38: #{gcnn_forward.1} parent=0 // pred_check
    _
  $region39: #{gcnn_forward.1} parent=0 // pred_check_branch
    %404 = sbr.rel (%p26) target = $region41
  $region40: #{gcnn_forward.1} parent=0 // pred_region
    %v405 = vld [vmem:[#allocation3] sm:$0xff]
    %v406 = vld [vmem:[%s4] sm:$0xff]
    %v407 = vld [vmem:[%s4 + $0x8] sm:$0xff]
    %v408 = vld [vmem:[%s4 + $0x10] sm:$0xff]
    %v409 = vld [vmem:[%s4 + $0x18] sm:$0xff]
    %v410 = vld [vmem:[%s4 + $0x20] sm:$0xff]
    %v411 = vld [vmem:[%s4 + $0x28] sm:$0xff]
    %v412 = vld [vmem:[%s4 + $0x30] sm:$0xff]
    %v413 = vld [vmem:[%s4 + $0x38] sm:$0xff]
    %v414 = vld [vmem:[%s4 + $0x40] sm:$0xff]
    %v415 = vld [vmem:[%s4 + $0x48] sm:$0xff]
    %v416 = vld [vmem:[%s4 + $0x50] sm:$0xff]
    %v417 = vld [vmem:[%s4 + $0x58] sm:$0xff]
    %v418 = vld [vmem:[%s4 + $0x60] sm:$0xff]
    %v419 = vld [vmem:[%s4 + $0x68] sm:$0xff]
    %v420 = vld [vmem:[%s4 + $0x70] sm:$0xff]
    %v421 = vld [vmem:[%s4 + $0x78] sm:$0xff]
    %v422 = vld [vmem:[%s5] sm:$0x1]
    %v424 = vlaneseq
    %v425 = vshrl.u32 %v424, 7
    %v426 = vsub.s32 0, %v425
    %v427 = vrot.slane %v422, %v426
    %429 = vmatprep.subr.mxu0 0.0
    %430 = vmatpush1.msra.mxu0 %v406
    %431 = vmatprep.subr.mxu0 0.0
    %432 = vmatpush1.msra.mxu0 %v407
    %433 = vmatprep.subr.mxu0 0.0
    %434 = vmatpush1.msra.mxu0 %v408
    %435 = vmatprep.subr.mxu0 0.0
    %436 = vmatpush1.msra.mxu0 %v409
    %437 = vmatprep.subr.mxu0 0.0
    %438 = vmatpush1.msra.mxu0 %v410
    %439 = vmatprep.subr.mxu0 0.0
    %440 = vmatpush1.msra.mxu0 %v411
    %441 = vmatprep.subr.mxu0 0.0
    %442 = vmatpush1.msra.mxu0 %v412
    %443 = vmatprep.subr.mxu0 0.0
    %444 = vmatpush1.msra.mxu0 %v413
    %445 = vmatprep.subr.mxu0 0.0
    %446 = vmatpush1.msra.mxu0 %v414
    %447 = vmatprep.subr.mxu0 0.0
    %448 = vmatpush1.msra.mxu0 %v415
    %449 = vmatprep.subr.mxu0 0.0
    %450 = vmatpush1.msra.mxu0 %v416
    %451 = vmatprep.subr.mxu0 0.0
    %452 = vmatpush1.msra.mxu0 %v417
    %453 = vmatprep.subr.mxu0 0.0
    %454 = vmatpush1.msra.mxu0 %v418
    %455 = vmatprep.subr.mxu0 0.0
    %456 = vmatpush1.msra.mxu0 %v419
    %457 = vmatprep.subr.mxu0 0.0
    %458 = vmatpush1.msra.mxu0 %v420
    %459 = vmatprep.subr.mxu0 0.0
    %460 = vmatpush1.msra.mxu0 %v421
    %461 = vmatprep.subr.mxu0 0.0
    %462 = vmatpush1.msra.mxu0 0.0
    %463 = vmatprep.subr.mxu0 0.0
    %464 = vmatpush1.msra.mxu0 0.0
    %465 = vmatprep.subr.mxu0 0.0
    %466 = vmatpush1.msra.mxu0 0.0
    %467 = vmatprep.subr.mxu0 0.0
    %468 = vmatpush1.msra.mxu0 0.0
    %469 = vmatprep.subr.mxu0 0.0
    %470 = vmatpush1.msra.mxu0 0.0
    %471 = vmatprep.subr.mxu0 0.0
    %472 = vmatpush1.msra.mxu0 0.0
    %473 = vmatprep.subr.mxu0 0.0
    %474 = vmatpush1.msra.mxu0 0.0
    %475 = vmatprep.subr.mxu0 0.0
    %476 = vmatpush1.msra.mxu0 0.0
    %477 = vmatprep.subr.mxu0 0.0
    %478 = vmatpush1.msra.mxu0 0.0
    %479 = vmatprep.subr.mxu0 0.0
    %480 = vmatpush1.msra.mxu0 0.0
    %481 = vmatprep.subr.mxu0 0.0
    %482 = vmatpush1.msra.mxu0 0.0
    %483 = vmatprep.subr.mxu0 0.0
    %484 = vmatpush1.msra.mxu0 0.0
    %485 = vmatprep.subr.mxu0 0.0
    %486 = vmatpush1.msra.mxu0 0.0
    %487 = vmatprep.subr.mxu0 0.0
    %488 = vmatpush1.msra.mxu0 0.0
    %489 = vmatprep.subr.mxu0 0.0
    %490 = vmatpush1.msra.mxu0 0.0
    %491 = vmatprep.subr.mxu0 0.0
    %492 = vmatpush1.msra.mxu0 0.0
    %493 = vmatprep.mubr.f32.mxu0 0.0
    %494 = vmatmul.mubr.f32.gmra.mrb[0].mxu0 %v405
    %v495 = vpop.f32.mrb[0].mxu0
    %v496 = vadd.f32 %v427, %v495
    %v497 = vpop.f32.mrb[0].mxu0
    %498 = vdwg.mxu0
    %v499 = vlaneseq
    %v500 = vand.u32 %v499, 127
    %vm501 = vcmp.lt.s32.totalorder %v500, 5
    %v502 = vsel %vm501, %v496, -3.4028235e+38
    %503 = vmax.xlane.f32.xlu0 %v502
    %v504 = vpop.xlane.xlu0 %503
    %v505 = vsub.f32 %v502, %v504
    %v506 = vmul.f32 %v505, 1.442695
    %v507 = vpow.pop %v506
    %508 = vadd.xlane.f32.xlu0 %v507
    %v509 = vpop.xlane.xlu0 %508
    %v510 = vrcp.pop %v509
    %v511 = vmul.f32 %v507, %v510
    %512 = vst [vmem:[%s6] sm:$0xff] %v511
  $region41: #{gcnn_forward.1} parent=0 // pred_fallthru
    _
  // Predicated region
  $region42: #{gcnn_forward.1} parent=0 // pred_check
    _
  $region43: #{gcnn_forward.1} parent=0 // pred_check_branch
    %514 = sbr.rel (0) target = $region45
  $region44: #{gcnn_forward.1} parent=0 // pred_region
    _
  $region45: #{gcnn_forward.1} parent=0 // pred_fallthru
    _
  // Predicated region
  $region46: #{gcnn_forward.1} parent=0 // pred_check
    _
  $region47: #{gcnn_forward.1} parent=0 // pred_check_branch
    %516 = sbr.rel (0) target = $region49
  $region48: #{gcnn_forward.1} parent=0 // pred_region
    _
  $region49: #{gcnn_forward.1} parent=0 // pred_fallthru
    _

</llo_original>
